<compile_context>
chip_gen: v6e
topology: v6e:2x2x1
jax: 0.10.0
libtpu: 0.0.40
codegen_flags: <defaults>
</compile_context>

<pallas_src>
import functools

import jax
import jax.numpy as jnp
from jax.experimental import pallas as pl
from jax.experimental.pallas import tpu as pltpu


def _round_up(x, m):
    return ((x + m - 1) // m) * m


def _td3_mlp_kernel(
    state_ref,
    w1_ref, b1_ref, w2_ref, b2_ref,
    w3_ref, b3_ref, w4_ref, b4_ref,
    wo_ref, bo_ref,
    out_ref,
):
    f32 = jnp.float32
    x = state_ref[...]                                   # (tile_b, S)
    h = jax.nn.relu(
        jnp.dot(x, w1_ref[...], preferred_element_type=f32) + b1_ref[...])
    h = jax.nn.relu(
        jnp.dot(h, w2_ref[...], preferred_element_type=f32) + b2_ref[...])
    h = jax.nn.relu(
        jnp.dot(h, w3_ref[...], preferred_element_type=f32) + b3_ref[...])
    h = jax.nn.relu(
        jnp.dot(h, w4_ref[...], preferred_element_type=f32) + b4_ref[...])
    # lane-dense output slab (action dim pre-padded to 128 lanes)
    out_ref[...] = jnp.tanh(
        jnp.dot(h, wo_ref[...], preferred_element_type=f32) + bo_ref[...])


def _full_spec(shape):
    # whole-array block, same block for every grid step (weights stay resident)
    return pl.BlockSpec(shape, lambda i: tuple(0 for _ in shape))


@functools.partial(jax.jit, static_argnames=("block_b",))
def td3_policy_forward(state, params, block_b=128):
    """TD3 policy forward.  state: (B, state_dim) -> action: (B, action_dim)."""
    B, S = state.shape
    H = params["w1"].shape[1]
    A = params["wo"].shape[1]

    # lane-dense output: pad action dim to a full 128-lane slab
    A_pad = _round_up(max(A, 1), 128)

    # batch tiling: round up to the 8-sublane granule; tile big batches across
    # a "parallel" grid axis
    tile_b = min(block_b, _round_up(B, 8))
    B_pad = _round_up(B, tile_b)

    state_f32 = state.astype(jnp.float32)
    if B_pad != B:
        state_f32 = jnp.pad(state_f32, ((0, B_pad - B), (0, 0)))

    wo_pad = jnp.zeros((H, A_pad), jnp.float32).at[:, :A].set(
        params["wo"].astype(jnp.float32))
    bo_pad = jnp.zeros((1, A_pad), jnp.float32).at[:, :A].set(
        params["bo"].astype(jnp.float32))

    weights = [
        params["w1"], params["b1"],
        params["w2"], params["b2"],
        params["w3"], params["b3"],
        params["w4"], params["b4"],
        wo_pad, bo_pad,
    ]

    grid = (B_pad // tile_b,)
    out_padded = pl.pallas_call(
        _td3_mlp_kernel,
        out_shape=jax.ShapeDtypeStruct((B_pad, A_pad), jnp.float32),
        grid_spec=pltpu.PrefetchScalarGridSpec(
            num_scalar_prefetch=0,
            grid=grid,
            in_specs=[pl.BlockSpec((tile_b, S), lambda i: (i, 0))]
                     + [_full_spec(w.shape) for w in weights],
            out_specs=pl.BlockSpec((tile_b, A_pad), lambda i: (i, 0)),
        ),
        compiler_params=pltpu.CompilerParams(
            dimension_semantics=("parallel",)),
    )(state_f32, *weights)

    return out_padded[:B, :A]


# ----------------------------------------------------------------------------
# Deterministic parameter construction (shapes from TD3_PolicyNetwork.__init__,
# weights stored pre-transposed to (in, out) layout).
# ----------------------------------------------------------------------------
def make_params(key, state_dim, action_dim, hidden, init_w=0.003):
    ks = jax.random.split(key, 10)

    def unif(k, shape, bound):
        return jax.random.uniform(k, shape, jnp.float32, -bound, bound)

    p = {}
    b = 1.0 / float(state_dim) ** 0.5
    p["w1"] = unif(ks[0], (state_dim, hidden), b)
    p["b1"] = unif(ks[1], (1, hidden), b)
    b = 1.0 / float(hidden) ** 0.5
    p["w2"] = unif(ks[2], (hidden, hidden), b)
    p["b2"] = unif(ks[3], (1, hidden), b)
    p["w3"] = unif(ks[4], (hidden, hidden), b)
    p["b3"] = unif(ks[5], (1, hidden), b)
    p["w4"] = unif(ks[6], (hidden, hidden), b)
    p["b4"] = unif(ks[7], (1, hidden), b)
    # output_linear: uniform(-init_w, init_w) (per module __init__ override)
    p["wo"] = unif(ks[8], (hidden, action_dim), init_w)
    p["bo"] = unif(ks[9], (1, action_dim), init_w)
    return p


# Pure-JAX reference (mirrors the PyTorch forward) for a sanity check.
def reference_forward(state, p):
    h = jax.nn.relu(state @ p["w1"] + p["b1"])
    h = jax.nn.relu(h @ p["w2"] + p["b2"])
    h = jax.nn.relu(h @ p["w3"] + p["b3"])
    h = jax.nn.relu(h @ p["w4"] + p["b4"])
    return jnp.tanh(h @ p["wo"] + p["bo"])


if __name__ == "__main__":
    B, S, A, H = 2, 11, 3, 32

    key = jax.random.PRNGKey(0)
    k_state, k_param = jax.random.split(key)
    state = jax.random.normal(k_state, (B, S), jnp.float32)
    params = make_params(k_param, S, A, H)

    action = td3_policy_forward(state, params)
    jax.block_until_ready(action)

    # correctness check against pure-JAX reference of the PyTorch forward
    action_ref = reference_forward(state, params)
    assert action.shape == (B, A)
    assert jnp.allclose(action, action_ref, atol=1e-5, rtol=1e-5)

    print("KERNEL_OK")
</pallas_src>

<mosaic_0001>
module attributes {stable_mosaic.version = 11 : i64} {
  func.func @_td3_mlp_kernel(%arg0: i32, %arg1: memref<8x11xf32, #tpu.memory_space<vmem>>, %arg2: memref<11x32xf32, #tpu.memory_space<vmem>>, %arg3: memref<1x32xf32, #tpu.memory_space<vmem>>, %arg4: memref<32x32xf32, #tpu.memory_space<vmem>>, %arg5: memref<1x32xf32, #tpu.memory_space<vmem>>, %arg6: memref<32x32xf32, #tpu.memory_space<vmem>>, %arg7: memref<1x32xf32, #tpu.memory_space<vmem>>, %arg8: memref<32x32xf32, #tpu.memory_space<vmem>>, %arg9: memref<1x32xf32, #tpu.memory_space<vmem>>, %arg10: memref<32x128xf32, #tpu.memory_space<vmem>>, %arg11: memref<1x128xf32, #tpu.memory_space<vmem>>, %arg12: memref<8x128xf32, #tpu.memory_space<vmem>>) attributes {dimension_semantics = [#tpu.dimension_semantics<parallel>], iteration_bounds = array<i64: 1>, scalar_prefetch = 0 : i64, scratch_operands = 0 : i64, tpu.core_type = #tpu.core_type<tc>, window_params = [{transform_indices = @transform_0, window_bounds = array<i64: 8, 11>}, {pipeline_mode = #tpu.pipeline_mode<synchronous>, transform_indices = @transform_1, window_bounds = array<i64: 11, 32>}, {pipeline_mode = #tpu.pipeline_mode<synchronous>, transform_indices = @transform_2, window_bounds = array<i64: 1, 32>}, {pipeline_mode = #tpu.pipeline_mode<synchronous>, transform_indices = @transform_3, window_bounds = array<i64: 32, 32>}, {pipeline_mode = #tpu.pipeline_mode<synchronous>, transform_indices = @transform_4, window_bounds = array<i64: 1, 32>}, {pipeline_mode = #tpu.pipeline_mode<synchronous>, transform_indices = @transform_5, window_bounds = array<i64: 32, 32>}, {pipeline_mode = #tpu.pipeline_mode<synchronous>, transform_indices = @transform_6, window_bounds = array<i64: 1, 32>}, {pipeline_mode = #tpu.pipeline_mode<synchronous>, transform_indices = @transform_7, window_bounds = array<i64: 32, 32>}, {pipeline_mode = #tpu.pipeline_mode<synchronous>, transform_indices = @transform_8, window_bounds = array<i64: 1, 32>}, {pipeline_mode = #tpu.pipeline_mode<synchronous>, transform_indices = @transform_9, window_bounds = array<i64: 32, 128>}, {pipeline_mode = #tpu.pipeline_mode<synchronous>, transform_indices = @transform_10, window_bounds = array<i64: 1, 128>}, {transform_indices = @transform_11, window_bounds = array<i64: 8, 128>}]} {
    %c0 = arith.constant 0 : index
    %c0_0 = arith.constant 0 : index
    %0 = vector.load %arg1[%c0, %c0_0] : memref<8x11xf32, #tpu.memory_space<vmem>>, vector<8x11xf32>
    %c0_1 = arith.constant 0 : index
    %c0_2 = arith.constant 0 : index
    %1 = vector.load %arg2[%c0_1, %c0_2] : memref<11x32xf32, #tpu.memory_space<vmem>>, vector<11x32xf32>
    %cst = arith.constant dense<0.000000e+00> : vector<8x32xf32>
    %2 = tpu.matmul %0, %1, %cst {dimension_numbers = #tpu.dot_dimension_numbers<[1], [0], [0], [1], [0, 0, 1, 1], [], []>} : vector<8x11xf32>, vector<11x32xf32>, vector<8x32xf32> -> vector<8x32xf32>
    %c0_3 = arith.constant 0 : index
    %c0_4 = arith.constant 0 : index
    %3 = vector.load %arg3[%c0_3, %c0_4] : memref<1x32xf32, #tpu.memory_space<vmem>>, vector<1x32xf32>
    %4 = vector.broadcast %3 : vector<1x32xf32> to vector<8x32xf32>
    %5 = arith.addf %2, %4 : vector<8x32xf32>
    %cst_5 = arith.constant 0.000000e+00 : f32
    %6 = vector.broadcast %cst_5 : f32 to vector<8x32xf32>
    %7 = arith.maximumf %5, %6 : vector<8x32xf32>
    %c0_6 = arith.constant 0 : index
    %c0_7 = arith.constant 0 : index
    %8 = vector.load %arg4[%c0_6, %c0_7] : memref<32x32xf32, #tpu.memory_space<vmem>>, vector<32x32xf32>
    %cst_8 = arith.constant dense<0.000000e+00> : vector<8x32xf32>
    %9 = tpu.matmul %7, %8, %cst_8 {dimension_numbers = #tpu.dot_dimension_numbers<[1], [0], [0], [1], [0, 0, 1, 1], [], []>} : vector<8x32xf32>, vector<32x32xf32>, vector<8x32xf32> -> vector<8x32xf32>
    %c0_9 = arith.constant 0 : index
    %c0_10 = arith.constant 0 : index
    %10 = vector.load %arg5[%c0_9, %c0_10] : memref<1x32xf32, #tpu.memory_space<vmem>>, vector<1x32xf32>
    %11 = vector.broadcast %10 : vector<1x32xf32> to vector<8x32xf32>
    %12 = arith.addf %9, %11 : vector<8x32xf32>
    %cst_11 = arith.constant 0.000000e+00 : f32
    %13 = vector.broadcast %cst_11 : f32 to vector<8x32xf32>
    %14 = arith.maximumf %12, %13 : vector<8x32xf32>
    %c0_12 = arith.constant 0 : index
    %c0_13 = arith.constant 0 : index
    %15 = vector.load %arg6[%c0_12, %c0_13] : memref<32x32xf32, #tpu.memory_space<vmem>>, vector<32x32xf32>
    %cst_14 = arith.constant dense<0.000000e+00> : vector<8x32xf32>
    %16 = tpu.matmul %14, %15, %cst_14 {dimension_numbers = #tpu.dot_dimension_numbers<[1], [0], [0], [1], [0, 0, 1, 1], [], []>} : vector<8x32xf32>, vector<32x32xf32>, vector<8x32xf32> -> vector<8x32xf32>
    %c0_15 = arith.constant 0 : index
    %c0_16 = arith.constant 0 : index
    %17 = vector.load %arg7[%c0_15, %c0_16] : memref<1x32xf32, #tpu.memory_space<vmem>>, vector<1x32xf32>
    %18 = vector.broadcast %17 : vector<1x32xf32> to vector<8x32xf32>
    %19 = arith.addf %16, %18 : vector<8x32xf32>
    %cst_17 = arith.constant 0.000000e+00 : f32
    %20 = vector.broadcast %cst_17 : f32 to vector<8x32xf32>
    %21 = arith.maximumf %19, %20 : vector<8x32xf32>
    %c0_18 = arith.constant 0 : index
    %c0_19 = arith.constant 0 : index
    %22 = vector.load %arg8[%c0_18, %c0_19] : memref<32x32xf32, #tpu.memory_space<vmem>>, vector<32x32xf32>
    %cst_20 = arith.constant dense<0.000000e+00> : vector<8x32xf32>
    %23 = tpu.matmul %21, %22, %cst_20 {dimension_numbers = #tpu.dot_dimension_numbers<[1], [0], [0], [1], [0, 0, 1, 1], [], []>} : vector<8x32xf32>, vector<32x32xf32>, vector<8x32xf32> -> vector<8x32xf32>
    %c0_21 = arith.constant 0 : index
    %c0_22 = arith.constant 0 : index
    %24 = vector.load %arg9[%c0_21, %c0_22] : memref<1x32xf32, #tpu.memory_space<vmem>>, vector<1x32xf32>
    %25 = vector.broadcast %24 : vector<1x32xf32> to vector<8x32xf32>
    %26 = arith.addf %23, %25 : vector<8x32xf32>
    %cst_23 = arith.constant 0.000000e+00 : f32
    %27 = vector.broadcast %cst_23 : f32 to vector<8x32xf32>
    %28 = arith.maximumf %26, %27 : vector<8x32xf32>
    %c0_24 = arith.constant 0 : index
    %c0_25 = arith.constant 0 : index
    %29 = vector.load %arg10[%c0_24, %c0_25] : memref<32x128xf32, #tpu.memory_space<vmem>>, vector<32x128xf32>
    %cst_26 = arith.constant dense<0.000000e+00> : vector<8x128xf32>
    %30 = tpu.matmul %28, %29, %cst_26 {dimension_numbers = #tpu.dot_dimension_numbers<[1], [0], [0], [1], [0, 0, 1, 1], [], []>} : vector<8x32xf32>, vector<32x128xf32>, vector<8x128xf32> -> vector<8x128xf32>
    %c0_27 = arith.constant 0 : index
    %c0_28 = arith.constant 0 : index
    %31 = vector.load %arg11[%c0_27, %c0_28] : memref<1x128xf32, #tpu.memory_space<vmem>>, vector<1x128xf32>
    %32 = vector.broadcast %31 : vector<1x128xf32> to vector<8x128xf32>
    %33 = arith.addf %30, %32 : vector<8x128xf32>
    %34 = math.tanh %33 : vector<8x128xf32>
    %c0_29 = arith.constant 0 : index
    %c0_30 = arith.constant 0 : index
    %35 = vector.load %arg12[%c0_29, %c0_30] : memref<8x128xf32, #tpu.memory_space<vmem>>, vector<8x128xf32>
    tpu.vector_store %arg12[%c0_29, %c0_30], %34 {strides = array<i32>} : memref<8x128xf32, #tpu.memory_space<vmem>>, vector<8x128xf32>,
    return
  }
  func.func @transform_0(%arg0: i32) -> (i32, i32) {
    %c0_i32 = arith.constant 0 : i32
    %c0_i32_0 = arith.constant 0 : i32
    return %arg0, %c0_i32 : i32, i32
  }
  func.func @transform_1(%arg0: i32) -> (i32, i32) {
    %c0_i32 = arith.constant 0 : i32
    %c0_i32_0 = arith.constant 0 : i32
    %c0_i32_1 = arith.constant 0 : i32
    return %c0_i32, %c0_i32_0 : i32, i32
  }
  func.func @transform_2(%arg0: i32) -> (i32, i32) {
    %c0_i32 = arith.constant 0 : i32
    %c0_i32_0 = arith.constant 0 : i32
    %c0_i32_1 = arith.constant 0 : i32
    return %c0_i32, %c0_i32_0 : i32, i32
  }
  func.func @transform_3(%arg0: i32) -> (i32, i32) {
    %c0_i32 = arith.constant 0 : i32
    %c0_i32_0 = arith.constant 0 : i32
    %c0_i32_1 = arith.constant 0 : i32
    return %c0_i32, %c0_i32_0 : i32, i32
  }
  func.func @transform_4(%arg0: i32) -> (i32, i32) {
    %c0_i32 = arith.constant 0 : i32
    %c0_i32_0 = arith.constant 0 : i32
    %c0_i32_1 = arith.constant 0 : i32
    return %c0_i32, %c0_i32_0 : i32, i32
  }
  func.func @transform_5(%arg0: i32) -> (i32, i32) {
    %c0_i32 = arith.constant 0 : i32
    %c0_i32_0 = arith.constant 0 : i32
    %c0_i32_1 = arith.constant 0 : i32
    return %c0_i32, %c0_i32_0 : i32, i32
  }
  func.func @transform_6(%arg0: i32) -> (i32, i32) {
    %c0_i32 = arith.constant 0 : i32
    %c0_i32_0 = arith.constant 0 : i32
    %c0_i32_1 = arith.constant 0 : i32
    return %c0_i32, %c0_i32_0 : i32, i32
  }
  func.func @transform_7(%arg0: i32) -> (i32, i32) {
    %c0_i32 = arith.constant 0 : i32
    %c0_i32_0 = arith.constant 0 : i32
    %c0_i32_1 = arith.constant 0 : i32
    return %c0_i32, %c0_i32_0 : i32, i32
  }
  func.func @transform_8(%arg0: i32) -> (i32, i32) {
    %c0_i32 = arith.constant 0 : i32
    %c0_i32_0 = arith.constant 0 : i32
    %c0_i32_1 = arith.constant 0 : i32
    return %c0_i32, %c0_i32_0 : i32, i32
  }
  func.func @transform_9(%arg0: i32) -> (i32, i32) {
    %c0_i32 = arith.constant 0 : i32
    %c0_i32_0 = arith.constant 0 : i32
    %c0_i32_1 = arith.constant 0 : i32
    return %c0_i32, %c0_i32_0 : i32, i32
  }
  func.func @transform_10(%arg0: i32) -> (i32, i32) {
    %c0_i32 = arith.constant 0 : i32
    %c0_i32_0 = arith.constant 0 : i32
    %c0_i32_1 = arith.constant 0 : i32
    return %c0_i32, %c0_i32_0 : i32, i32
  }
  func.func @transform_11(%arg0: i32) -> (i32, i32) {
    %c0_i32 = arith.constant 0 : i32
    %c0_i32_0 = arith.constant 0 : i32
    return %arg0, %c0_i32 : i32, i32
  }
}

</mosaic_0001>

<llo_original>
// kernel: td3_policy_forward.1
$region0: #{td3_policy_forward.1}
  #allocation0 [shape = 'u32[]', space=smem, size = 0x4, offset = 0x4, fixed_abs, tag = 'smem constant byte address 0x4 - core index']
  #allocation1 [shape = 'u32[144,128]{1,0:T(1,128)}', space=vmem, size = 0x12000, scoped, tag = 'internal scratch']
  %s0 = inlined_call_operand.vmem [shape: f32[8,11], index: 0, kind: input, shape index: {}]
  %s1 = inlined_call_operand.vmem [shape: f32[11,32], index: 1, kind: input, shape index: {}]
  %s2 = inlined_call_operand.vmem [shape: f32[1,32], index: 2, kind: input, shape index: {}]
  %s3 = inlined_call_operand.vmem [shape: f32[32,32], index: 3, kind: input, shape index: {}]
  %s4 = inlined_call_operand.vmem [shape: f32[1,32], index: 4, kind: input, shape index: {}]
  %s5 = inlined_call_operand.vmem [shape: f32[32,32], index: 5, kind: input, shape index: {}]
  %s6 = inlined_call_operand.vmem [shape: f32[1,32], index: 6, kind: input, shape index: {}]
  %s7 = inlined_call_operand.vmem [shape: f32[32,32], index: 7, kind: input, shape index: {}]
  %s8 = inlined_call_operand.vmem [shape: f32[1,32], index: 8, kind: input, shape index: {}]
  %s9 = inlined_call_operand.vmem [shape: f32[32,128], index: 9, kind: input, shape index: {}]
  %s10 = inlined_call_operand.vmem [shape: f32[1,128], index: 10, kind: input, shape index: {}]
  %s11 = inlined_call_operand.vmem [shape: f32[8,128], index: 11, kind: output, shape index: {}]
  %s12 = sld [smem:[#allocation0]]
  $region54: #{td3_policy_forward.1} parent=0
    _
  %s14 = ssub.s32 1, %s12
  %s15 = scalar_select 0, %s14, %s12
  // Predicated region
  $region2: #{td3_policy_forward.1} parent=0 // pred_check
    _
  $region3: #{td3_policy_forward.1} parent=0 // pred_check_branch
    %17 = sbr.rel (0) target = $region5
  $region4: #{td3_policy_forward.1} parent=0 // pred_region
    _
  $region5: #{td3_policy_forward.1} parent=0 // pred_fallthru
    _
  // Predicated region
  $region6: #{td3_policy_forward.1} parent=0 // pred_check
    _
  $region7: #{td3_policy_forward.1} parent=0 // pred_check_branch
    %19 = sbr.rel (0) target = $region9
  $region8: #{td3_policy_forward.1} parent=0 // pred_region
    _
  $region9: #{td3_policy_forward.1} parent=0 // pred_fallthru
    _
  // Predicated region
  $region10: #{td3_policy_forward.1} parent=0 // pred_check
    _
  $region11: #{td3_policy_forward.1} parent=0 // pred_check_branch
    %21 = sbr.rel (0) target = $region13
  $region12: #{td3_policy_forward.1} parent=0 // pred_region
    _
  $region13: #{td3_policy_forward.1} parent=0 // pred_fallthru
    _
  // Predicated region
  $region14: #{td3_policy_forward.1} parent=0 // pred_check
    _
  $region15: #{td3_policy_forward.1} parent=0 // pred_check_branch
    %23 = sbr.rel (0) target = $region17
  $region16: #{td3_policy_forward.1} parent=0 // pred_region
    _
  $region17: #{td3_policy_forward.1} parent=0 // pred_fallthru
    _
  // Predicated region
  $region18: #{td3_policy_forward.1} parent=0 // pred_check
    _
  $region19: #{td3_policy_forward.1} parent=0 // pred_check_branch
    %25 = sbr.rel (0) target = $region21
  $region20: #{td3_policy_forward.1} parent=0 // pred_region
    _
  $region21: #{td3_policy_forward.1} parent=0 // pred_fallthru
    _
  // Predicated region
  $region22: #{td3_policy_forward.1} parent=0 // pred_check
    _
  $region23: #{td3_policy_forward.1} parent=0 // pred_check_branch
    %27 = sbr.rel (0) target = $region25
  $region24: #{td3_policy_forward.1} parent=0 // pred_region
    _
  $region25: #{td3_policy_forward.1} parent=0 // pred_fallthru
    _
  // Predicated region
  $region26: #{td3_policy_forward.1} parent=0 // pred_check
    _
  $region27: #{td3_policy_forward.1} parent=0 // pred_check_branch
    %29 = sbr.rel (0) target = $region29
  $region28: #{td3_policy_forward.1} parent=0 // pred_region
    _
  $region29: #{td3_policy_forward.1} parent=0 // pred_fallthru
    _
  // Predicated region
  $region30: #{td3_policy_forward.1} parent=0 // pred_check
    _
  $region31: #{td3_policy_forward.1} parent=0 // pred_check_branch
    %31 = sbr.rel (0) target = $region33
  $region32: #{td3_policy_forward.1} parent=0 // pred_region
    _
  $region33: #{td3_policy_forward.1} parent=0 // pred_fallthru
    _
  // Predicated region
  $region34: #{td3_policy_forward.1} parent=0 // pred_check
    _
  $region35: #{td3_policy_forward.1} parent=0 // pred_check_branch
    %33 = sbr.rel (0) target = $region37
  $region36: #{td3_policy_forward.1} parent=0 // pred_region
    _
  $region37: #{td3_policy_forward.1} parent=0 // pred_fallthru
    _
  // Predicated region
  $region38: #{td3_policy_forward.1} parent=0 // pred_check
    _
  $region39: #{td3_policy_forward.1} parent=0 // pred_check_branch
    %35 = sbr.rel (0) target = $region41
  $region40: #{td3_policy_forward.1} parent=0 // pred_region
    _
  $region41: #{td3_policy_forward.1} parent=0 // pred_fallthru
    _
  // Predicated region
  $region42: #{td3_policy_forward.1} parent=0 // pred_check
    _
  $region43: #{td3_policy_forward.1} parent=0 // pred_check_branch
    %37 = sbr.rel (0) target = $region45
  $region44: #{td3_policy_forward.1} parent=0 // pred_region
    _
  $region45: #{td3_policy_forward.1} parent=0 // pred_fallthru
    _
  %v38 = vld [vmem:[%s0] sm:$0xff]
  %v39 = vld [vmem:[%s1] sm:$0xff]
  %v40 = vld [vmem:[%s1 + $0x8] sm:$0x7]
  %v41 = vld [vmem:[%s2] sm:$0x1]
  %v43 = vlaneseq
  %v44 = vshrl.u32 %v43, 7
  %v45 = vsub.s32 0, %v44
  %v46 = vrot.slane %v41, %v45
  %vm48 = vcmask 89088
  %v50 = vsel %vm48, %v38, 0
  %vm52 = vcmask 1042432
  %v54 = vsel %vm52, %v40, 0
  %56 = vmatprep.subr.mxu0 0.0
  %57 = vmatpush1.msra.mxu0 0.0
  %58 = vmatprep.subr.mxu0 0.0
  %59 = vmatpush1.msra.mxu0 0.0
  %60 = vmatprep.subr.mxu0 0.0
  %61 = vmatpush1.msra.mxu0 0.0
  %62 = vmatprep.subr.mxu0 0.0
  %63 = vmatpush1.msra.mxu0 0.0
  %64 = vmatprep.subr.mxu0 0.0
  %65 = vmatpush1.msra.mxu0 0.0
  %66 = vmatprep.subr.mxu0 0.0
  %67 = vmatpush1.msra.mxu0 0.0
  %68 = vmatprep.subr.mxu0 0.0
  %69 = vmatpush1.msra.mxu0 0.0
  %70 = vmatprep.subr.mxu0 0.0
  %71 = vmatpush1.msra.mxu0 0.0
  %72 = vmatprep.subr.mxu0 0.0
  %73 = vmatpush1.msra.mxu0 0.0
  %74 = vmatprep.subr.mxu0 0.0
  %75 = vmatpush1.msra.mxu0 0.0
  %76 = vmatprep.subr.mxu0 0.0
  %77 = vmatpush1.msra.mxu0 0.0
  %78 = vmatprep.subr.mxu0 0.0
  %79 = vmatpush1.msra.mxu0 0.0
  %80 = vmatprep.subr.mxu0 0.0
  %81 = vmatpush1.msra.mxu0 0.0
  %82 = vmatprep.subr.mxu0 0.0
  %83 = vmatpush1.msra.mxu0 0.0
  %84 = vmatprep.subr.mxu0 0.0
  %85 = vmatpush1.msra.mxu0 %v54
  %86 = vmatprep.subr.mxu0 0.0
  %87 = vmatpush1.msra.mxu0 %v39
  %88 = vmatprep.subr.mxu0 0.0
  %89 = vmatpush2.msra.mxu0 0.0
  %90 = vmatprep.subr.mxu0 0.0
  %91 = vmatpush2.msra.mxu0 0.0
  %92 = vmatprep.subr.mxu0 0.0
  %93 = vmatpush2.msra.mxu0 0.0
  %94 = vmatprep.subr.mxu0 0.0
  %95 = vmatpush2.msra.mxu0 0.0
  %96 = vmatprep.subr.mxu0 0.0
  %97 = vmatpush2.msra.mxu0 0.0
  %98 = vmatprep.subr.mxu0 0.0
  %99 = vmatpush2.msra.mxu0 0.0
  %100 = vmatprep.subr.mxu0 0.0
  %101 = vmatpush2.msra.mxu0 0.0
  %102 = vmatprep.subr.mxu0 0.0
  %103 = vmatpush2.msra.mxu0 0.0
  %104 = vmatprep.subr.mxu0 0.0
  %105 = vmatpush2.msra.mxu0 0.0
  %106 = vmatprep.subr.mxu0 0.0
  %107 = vmatpush2.msra.mxu0 0.0
  %108 = vmatprep.subr.mxu0 0.0
  %109 = vmatpush2.msra.mxu0 0.0
  %110 = vmatprep.subr.mxu0 0.0
  %111 = vmatpush2.msra.mxu0 0.0
  %112 = vmatprep.subr.mxu0 0.0
  %113 = vmatpush2.msra.mxu0 0.0
  %114 = vmatprep.subr.mxu0 0.0
  %115 = vmatpush2.msra.mxu0 0.0
  %116 = vmatprep.subr.mxu0 0.0
  %117 = vmatpush2.msra.mxu0 0.0
  %118 = vmatprep.subr.mxu0 0.0
  %119 = vmatpush2.msra.mxu0 0.0
  %120 = vmatprep.mubr.f32.mxu0 0.0
  %121 = vmatmul.mubr.f32.gmra.mxu0 %v50
  %v122 = vpop.f32.mrf.mxu0
  %v123 = vadd.f32 %v46, %v122
  %v124 = vpop.f32.mrf.mxu0
  %125 = vdwg.mxu0
  %v126 = vmax.f32 %v123, 0.0
  %v127 = vld [vmem:[%s3] sm:$0xff]
  %v128 = vld [vmem:[%s3 + $0x8] sm:$0xff]
  %v129 = vld [vmem:[%s3 + $0x10] sm:$0xff]
  %v130 = vld [vmem:[%s3 + $0x18] sm:$0xff]
  %v131 = vld [vmem:[%s4] sm:$0x1]
  %v133 = vlaneseq
  %v134 = vshrl.u32 %v133, 7
  %v135 = vsub.s32 0, %v134
  %v136 = vrot.slane %v131, %v135
  %vm138 = vcmask 261120
  %v140 = vsel %vm138, %v126, 0
  %142 = vmatprep.subr.mxu0 0.0
  %143 = vmatpush1.msra.mxu0 0.0
  %144 = vmatprep.subr.mxu0 0.0
  %145 = vmatpush1.msra.mxu0 0.0
  %146 = vmatprep.subr.mxu0 0.0
  %147 = vmatpush1.msra.mxu0 0.0
  %148 = vmatprep.subr.mxu0 0.0
  %149 = vmatpush1.msra.mxu0 0.0
  %150 = vmatprep.subr.mxu0 0.0
  %151 = vmatpush1.msra.mxu0 0.0
  %152 = vmatprep.subr.mxu0 0.0
  %153 = vmatpush1.msra.mxu0 0.0
  %154 = vmatprep.subr.mxu0 0.0
  %155 = vmatpush1.msra.mxu0 0.0
  %156 = vmatprep.subr.mxu0 0.0
  %157 = vmatpush1.msra.mxu0 0.0
  %158 = vmatprep.subr.mxu0 0.0
  %159 = vmatpush1.msra.mxu0 0.0
  %160 = vmatprep.subr.mxu0 0.0
  %161 = vmatpush1.msra.mxu0 0.0
  %162 = vmatprep.subr.mxu0 0.0
  %163 = vmatpush1.msra.mxu0 0.0
  %164 = vmatprep.subr.mxu0 0.0
  %165 = vmatpush1.msra.mxu0 0.0
  %166 = vmatprep.subr.mxu0 0.0
  %167 = vmatpush1.msra.mxu0 %v130
  %168 = vmatprep.subr.mxu0 0.0
  %169 = vmatpush1.msra.mxu0 %v129
  %170 = vmatprep.subr.mxu0 0.0
  %171 = vmatpush1.msra.mxu0 %v128
  %172 = vmatprep.subr.mxu0 0.0
  %173 = vmatpush1.msra.mxu0 %v127
  %174 = vmatprep.subr.mxu0 0.0
  %175 = vmatpush2.msra.mxu0 0.0
  %176 = vmatprep.subr.mxu0 0.0
  %177 = vmatpush2.msra.mxu0 0.0
  %178 = vmatprep.subr.mxu0 0.0
  %179 = vmatpush2.msra.mxu0 0.0
  %180 = vmatprep.subr.mxu0 0.0
  %181 = vmatpush2.msra.mxu0 0.0
  %182 = vmatprep.subr.mxu0 0.0
  %183 = vmatpush2.msra.mxu0 0.0
  %184 = vmatprep.subr.mxu0 0.0
  %185 = vmatpush2.msra.mxu0 0.0
  %186 = vmatprep.subr.mxu0 0.0
  %187 = vmatpush2.msra.mxu0 0.0
  %188 = vmatprep.subr.mxu0 0.0
  %189 = vmatpush2.msra.mxu0 0.0
  %190 = vmatprep.subr.mxu0 0.0
  %191 = vmatpush2.msra.mxu0 0.0
  %192 = vmatprep.subr.mxu0 0.0
  %193 = vmatpush2.msra.mxu0 0.0
  %194 = vmatprep.subr.mxu0 0.0
  %195 = vmatpush2.msra.mxu0 0.0
  %196 = vmatprep.subr.mxu0 0.0
  %197 = vmatpush2.msra.mxu0 0.0
  %198 = vmatprep.subr.mxu0 0.0
  %199 = vmatpush2.msra.mxu0 0.0
  %200 = vmatprep.subr.mxu0 0.0
  %201 = vmatpush2.msra.mxu0 0.0
  %202 = vmatprep.subr.mxu0 0.0
  %203 = vmatpush2.msra.mxu0 0.0
  %204 = vmatprep.subr.mxu0 0.0
  %205 = vmatpush2.msra.mxu0 0.0
  %206 = vmatprep.mubr.f32.mxu0 0.0
  %207 = vmatmul.mubr.f32.gmra.mxu0 %v140
  %v208 = vpop.f32.mrf.mxu0
  %v209 = vadd.f32 %v136, %v208
  %v210 = vpop.f32.mrf.mxu0
  %211 = vdwg.mxu0
  %v212 = vmax.f32 %v209, 0.0
  %v213 = vld [vmem:[%s5] sm:$0xff]
  %v214 = vld [vmem:[%s5 + $0x8] sm:$0xff]
  %v215 = vld [vmem:[%s5 + $0x10] sm:$0xff]
  %v216 = vld [vmem:[%s5 + $0x18] sm:$0xff]
  %v217 = vld [vmem:[%s6] sm:$0x1]
  %v219 = vlaneseq
  %v220 = vshrl.u32 %v219, 7
  %v221 = vsub.s32 0, %v220
  %v222 = vrot.slane %v217, %v221
  %v225 = vsel %vm138, %v212, 0
  %227 = vmatprep.subr.mxu0 0.0
  %228 = vmatpush1.msra.mxu0 0.0
  %229 = vmatprep.subr.mxu0 0.0
  %230 = vmatpush1.msra.mxu0 0.0
  %231 = vmatprep.subr.mxu0 0.0
  %232 = vmatpush1.msra.mxu0 0.0
  %233 = vmatprep.subr.mxu0 0.0
  %234 = vmatpush1.msra.mxu0 0.0
  %235 = vmatprep.subr.mxu0 0.0
  %236 = vmatpush1.msra.mxu0 0.0
  %237 = vmatprep.subr.mxu0 0.0
  %238 = vmatpush1.msra.mxu0 0.0
  %239 = vmatprep.subr.mxu0 0.0
  %240 = vmatpush1.msra.mxu0 0.0
  %241 = vmatprep.subr.mxu0 0.0
  %242 = vmatpush1.msra.mxu0 0.0
  %243 = vmatprep.subr.mxu0 0.0
  %244 = vmatpush1.msra.mxu0 0.0
  %245 = vmatprep.subr.mxu0 0.0
  %246 = vmatpush1.msra.mxu0 0.0
  %247 = vmatprep.subr.mxu0 0.0
  %248 = vmatpush1.msra.mxu0 0.0
  %249 = vmatprep.subr.mxu0 0.0
  %250 = vmatpush1.msra.mxu0 0.0
  %251 = vmatprep.subr.mxu0 0.0
  %252 = vmatpush1.msra.mxu0 %v216
  %253 = vmatprep.subr.mxu0 0.0
  %254 = vmatpush1.msra.mxu0 %v215
  %255 = vmatprep.subr.mxu0 0.0
  %256 = vmatpush1.msra.mxu0 %v214
  %257 = vmatprep.subr.mxu0 0.0
  %258 = vmatpush1.msra.mxu0 %v213
  %259 = vmatprep.subr.mxu0 0.0
  %260 = vmatpush2.msra.mxu0 0.0
  %261 = vmatprep.subr.mxu0 0.0
  %262 = vmatpush2.msra.mxu0 0.0
  %263 = vmatprep.subr.mxu0 0.0
  %264 = vmatpush2.msra.mxu0 0.0
  %265 = vmatprep.subr.mxu0 0.0
  %266 = vmatpush2.msra.mxu0 0.0
  %267 = vmatprep.subr.mxu0 0.0
  %268 = vmatpush2.msra.mxu0 0.0
  %269 = vmatprep.subr.mxu0 0.0
  %270 = vmatpush2.msra.mxu0 0.0
  %271 = vmatprep.subr.mxu0 0.0
  %272 = vmatpush2.msra.mxu0 0.0
  %273 = vmatprep.subr.mxu0 0.0
  %274 = vmatpush2.msra.mxu0 0.0
  %275 = vmatprep.subr.mxu0 0.0
  %276 = vmatpush2.msra.mxu0 0.0
  %277 = vmatprep.subr.mxu0 0.0
  %278 = vmatpush2.msra.mxu0 0.0
  %279 = vmatprep.subr.mxu0 0.0
  %280 = vmatpush2.msra.mxu0 0.0
  %281 = vmatprep.subr.mxu0 0.0
  %282 = vmatpush2.msra.mxu0 0.0
  %283 = vmatprep.subr.mxu0 0.0
  %284 = vmatpush2.msra.mxu0 0.0
  %285 = vmatprep.subr.mxu0 0.0
  %286 = vmatpush2.msra.mxu0 0.0
  %287 = vmatprep.subr.mxu0 0.0
  %288 = vmatpush2.msra.mxu0 0.0
  %289 = vmatprep.subr.mxu0 0.0
  %290 = vmatpush2.msra.mxu0 0.0
  %291 = vmatprep.mubr.f32.mxu0 0.0
  %292 = vmatmul.mubr.f32.gmra.mxu0 %v225
  %v293 = vpop.f32.mrf.mxu0
  %v294 = vadd.f32 %v222, %v293
  %v295 = vpop.f32.mrf.mxu0
  %296 = vdwg.mxu0
  %v297 = vmax.f32 %v294, 0.0
  %v298 = vld [vmem:[%s7] sm:$0xff]
  %v299 = vld [vmem:[%s7 + $0x8] sm:$0xff]
  %v300 = vld [vmem:[%s7 + $0x10] sm:$0xff]
  %v301 = vld [vmem:[%s7 + $0x18] sm:$0xff]
  %v302 = vld [vmem:[%s8] sm:$0x1]
  %v304 = vlaneseq
  %v305 = vshrl.u32 %v304, 7
  %v306 = vsub.s32 0, %v305
  %v307 = vrot.slane %v302, %v306
  %v310 = vsel %vm138, %v297, 0
  %312 = vmatprep.subr.mxu0 0.0
  %313 = vmatpush1.msra.mxu0 0.0
  %314 = vmatprep.subr.mxu0 0.0
  %315 = vmatpush1.msra.mxu0 0.0
  %316 = vmatprep.subr.mxu0 0.0
  %317 = vmatpush1.msra.mxu0 0.0
  %318 = vmatprep.subr.mxu0 0.0
  %319 = vmatpush1.msra.mxu0 0.0
  %320 = vmatprep.subr.mxu0 0.0
  %321 = vmatpush1.msra.mxu0 0.0
  %322 = vmatprep.subr.mxu0 0.0
  %323 = vmatpush1.msra.mxu0 0.0
  %324 = vmatprep.subr.mxu0 0.0
  %325 = vmatpush1.msra.mxu0 0.0
  %326 = vmatprep.subr.mxu0 0.0
  %327 = vmatpush1.msra.mxu0 0.0
  %328 = vmatprep.subr.mxu0 0.0
  %329 = vmatpush1.msra.mxu0 0.0
  %330 = vmatprep.subr.mxu0 0.0
  %331 = vmatpush1.msra.mxu0 0.0
  %332 = vmatprep.subr.mxu0 0.0
  %333 = vmatpush1.msra.mxu0 0.0
  %334 = vmatprep.subr.mxu0 0.0
  %335 = vmatpush1.msra.mxu0 0.0
  %336 = vmatprep.subr.mxu0 0.0
  %337 = vmatpush1.msra.mxu0 %v301
  %338 = vmatprep.subr.mxu0 0.0
  %339 = vmatpush1.msra.mxu0 %v300
  %340 = vmatprep.subr.mxu0 0.0
  %341 = vmatpush1.msra.mxu0 %v299
  %342 = vmatprep.subr.mxu0 0.0
  %343 = vmatpush1.msra.mxu0 %v298
  %344 = vmatprep.subr.mxu0 0.0
  %345 = vmatpush2.msra.mxu0 0.0
  %346 = vmatprep.subr.mxu0 0.0
  %347 = vmatpush2.msra.mxu0 0.0
  %348 = vmatprep.subr.mxu0 0.0
  %349 = vmatpush2.msra.mxu0 0.0
  %350 = vmatprep.subr.mxu0 0.0
  %351 = vmatpush2.msra.mxu0 0.0
  %352 = vmatprep.subr.mxu0 0.0
  %353 = vmatpush2.msra.mxu0 0.0
  %354 = vmatprep.subr.mxu0 0.0
  %355 = vmatpush2.msra.mxu0 0.0
  %356 = vmatprep.subr.mxu0 0.0
  %357 = vmatpush2.msra.mxu0 0.0
  %358 = vmatprep.subr.mxu0 0.0
  %359 = vmatpush2.msra.mxu0 0.0
  %360 = vmatprep.subr.mxu0 0.0
  %361 = vmatpush2.msra.mxu0 0.0
  %362 = vmatprep.subr.mxu0 0.0
  %363 = vmatpush2.msra.mxu0 0.0
  %364 = vmatprep.subr.mxu0 0.0
  %365 = vmatpush2.msra.mxu0 0.0
  %366 = vmatprep.subr.mxu0 0.0
  %367 = vmatpush2.msra.mxu0 0.0
  %368 = vmatprep.subr.mxu0 0.0
  %369 = vmatpush2.msra.mxu0 0.0
  %370 = vmatprep.subr.mxu0 0.0
  %371 = vmatpush2.msra.mxu0 0.0
  %372 = vmatprep.subr.mxu0 0.0
  %373 = vmatpush2.msra.mxu0 0.0
  %374 = vmatprep.subr.mxu0 0.0
  %375 = vmatpush2.msra.mxu0 0.0
  %376 = vmatprep.mubr.f32.mxu0 0.0
  %377 = vmatmul.mubr.f32.gmra.mxu0 %v310
  %v378 = vpop.f32.mrf.mxu0
  %v379 = vadd.f32 %v307, %v378
  %v380 = vpop.f32.mrf.mxu0
  %381 = vdwg.mxu0
  %v382 = vmax.f32 %v379, 0.0
  %v383 = vld [vmem:[%s9] sm:$0xff]
  %v384 = vld [vmem:[%s9 + $0x8] sm:$0xff]
  %v385 = vld [vmem:[%s9 + $0x10] sm:$0xff]
  %v386 = vld [vmem:[%s9 + $0x18] sm:$0xff]
  %v387 = vld [vmem:[%s10] sm:$0x1]
  %v389 = vlaneseq
  %v390 = vshrl.u32 %v389, 7
  %v391 = vsub.s32 0, %v390
  %v392 = vrot.slane %v387, %v391
  %v395 = vsel %vm138, %v382, 0
  %397 = vmatprep.subr.mxu0 0.0
  %398 = vmatpush1.msra.mxu0 0.0
  %399 = vmatprep.subr.mxu0 0.0
  %400 = vmatpush1.msra.mxu0 0.0
  %401 = vmatprep.subr.mxu0 0.0
  %402 = vmatpush1.msra.mxu0 0.0
  %403 = vmatprep.subr.mxu0 0.0
  %404 = vmatpush1.msra.mxu0 0.0
  %405 = vmatprep.subr.mxu0 0.0
  %406 = vmatpush1.msra.mxu0 0.0
  %407 = vmatprep.subr.mxu0 0.0
  %408 = vmatpush1.msra.mxu0 0.0
  %409 = vmatprep.subr.mxu0 0.0
  %410 = vmatpush1.msra.mxu0 0.0
  %411 = vmatprep.subr.mxu0 0.0
  %412 = vmatpush1.msra.mxu0 0.0
  %413 = vmatprep.subr.mxu0 0.0
  %414 = vmatpush1.msra.mxu0 0.0
  %415 = vmatprep.subr.mxu0 0.0
  %416 = vmatpush1.msra.mxu0 0.0
  %417 = vmatprep.subr.mxu0 0.0
  %418 = vmatpush1.msra.mxu0 0.0
  %419 = vmatprep.subr.mxu0 0.0
  %420 = vmatpush1.msra.mxu0 0.0
  %421 = vmatprep.subr.mxu0 0.0
  %422 = vmatpush1.msra.mxu0 %v386
  %423 = vmatprep.subr.mxu0 0.0
  %424 = vmatpush1.msra.mxu0 %v385
  %425 = vmatprep.subr.mxu0 0.0
  %426 = vmatpush1.msra.mxu0 %v384
  %427 = vmatprep.subr.mxu0 0.0
  %428 = vmatpush1.msra.mxu0 %v383
  %429 = vmatprep.subr.mxu0 0.0
  %430 = vmatpush2.msra.mxu0 0.0
  %431 = vmatprep.subr.mxu0 0.0
  %432 = vmatpush2.msra.mxu0 0.0
  %433 = vmatprep.subr.mxu0 0.0
  %434 = vmatpush2.msra.mxu0 0.0
  %435 = vmatprep.subr.mxu0 0.0
  %436 = vmatpush2.msra.mxu0 0.0
  %437 = vmatprep.subr.mxu0 0.0
  %438 = vmatpush2.msra.mxu0 0.0
  %439 = vmatprep.subr.mxu0 0.0
  %440 = vmatpush2.msra.mxu0 0.0
  %441 = vmatprep.subr.mxu0 0.0
  %442 = vmatpush2.msra.mxu0 0.0
  %443 = vmatprep.subr.mxu0 0.0
  %444 = vmatpush2.msra.mxu0 0.0
  %445 = vmatprep.subr.mxu0 0.0
  %446 = vmatpush2.msra.mxu0 0.0
  %447 = vmatprep.subr.mxu0 0.0
  %448 = vmatpush2.msra.mxu0 0.0
  %449 = vmatprep.subr.mxu0 0.0
  %450 = vmatpush2.msra.mxu0 0.0
  %451 = vmatprep.subr.mxu0 0.0
  %452 = vmatpush2.msra.mxu0 0.0
  %453 = vmatprep.subr.mxu0 0.0
  %454 = vmatpush2.msra.mxu0 0.0
  %455 = vmatprep.subr.mxu0 0.0
  %456 = vmatpush2.msra.mxu0 0.0
  %457 = vmatprep.subr.mxu0 0.0
  %458 = vmatpush2.msra.mxu0 0.0
  %459 = vmatprep.subr.mxu0 0.0
  %460 = vmatpush2.msra.mxu0 0.0
  %461 = vmatprep.mubr.f32.mxu0 0.0
  %462 = vmatmul.mubr.f32.gmra.mxu0 %v395
  %v463 = vpop.f32.mrf.mxu0
  %v464 = vadd.f32 %v392, %v463
  %v465 = vpop.f32.mrf.mxu0
  %466 = vdwg.mxu0
  %v467 = vtanh.pop %v464
  %468 = vst [vmem:[%s11] sm:$0xff] %v467
  // Predicated region
  $region46: #{td3_policy_forward.1} parent=0 // pred_check
    _
  $region47: #{td3_policy_forward.1} parent=0 // pred_check_branch
    %470 = sbr.rel (0) target = $region49
  $region48: #{td3_policy_forward.1} parent=0 // pred_region
    _
  $region49: #{td3_policy_forward.1} parent=0 // pred_fallthru
    _
  // Predicated region
  $region50: #{td3_policy_forward.1} parent=0 // pred_check
    _
  $region51: #{td3_policy_forward.1} parent=0 // pred_check_branch
    %472 = sbr.rel (0) target = $region53
  $region52: #{td3_policy_forward.1} parent=0 // pred_region
    _
  $region53: #{td3_policy_forward.1} parent=0 // pred_fallthru
    _

</llo_original>
